<compile_context>
chip_gen: v5e
topology: v5e:2x2
jax: 0.10.0
libtpu: 0.0.40
codegen_flags: <defaults>
</compile_context>

<pallas_src>
import functools

import jax
import jax.numpy as jnp
from jax.experimental import pallas as pl
from jax.experimental.pallas import tpu as pltpu


def _round_up(x, m):
    return (x + m - 1) // m * m


def _cdiv(a, b):
    return -(-a // b)


def _mlp_kernel(x_ref, *refs):
    """Fused MLP forward for one batch tile.

    refs = (w0, b0, w1, b1, ..., wL, bL, out_ref).  Feature dims are the true
    (unpadded) sizes; Mosaic handles lane padding internally.  Hidden layers
    get tanh; the last layer is linear.
    """
    out_ref = refs[-1]
    wb_refs = refs[:-1]
    n_layers = len(wb_refs) // 2

    z = x_ref[...]                              # (bt, dim) f32
    for li in range(n_layers):
        w = wb_refs[2 * li][...]                # (in, out), f32 or bf16
        b = wb_refs[2 * li + 1][...]            # (1, out) f32 -> broadcasts
        # Cast LHS to the weight dtype (no-op for f32; cheap pack for bf16);
        # accumulate in f32 on the MXU.
        z = jnp.dot(z.astype(w.dtype), w,
                    preferred_element_type=jnp.float32) + b
        if li != n_layers - 1:
            z = jnp.tanh(z)                     # f32 tanh on the EUP
    out_ref[...] = z.astype(out_ref.dtype)


def branch_forward(momenta, weights, biases, dim, K, *,
                   batch_tile=1024, min_tiles=1, use_bf16_operands=True):
    """momenta: [..., dim] float32. Returns [..., dim, K].

    weights[i]: [in_i, out_i] (transposed vs. PyTorch), biases[i]: [1, out_i].
    min_tiles=2 is recommended on v7x (2 TensorCores) when B is large.
    """
    lead = momenta.shape[:-1]
    assert momenta.shape[-1] == dim
    x2 = momenta.reshape(-1, dim)
    B = x2.shape[0]
    out_feat = dim * K
    assert weights[-1].shape[1] == out_feat

    # ---- balanced batch tiling (sublane-aligned, minimal padded rows) ----
    B8 = _round_up(max(B, 1), 8)
    n_tiles = max(int(min_tiles), _cdiv(B8, int(batch_tile)))
    n_tiles = max(1, min(n_tiles, B8 // 8))     # keep bt >= 8
    bt = _round_up(_cdiv(B8, n_tiles), 8)
    n_tiles = _cdiv(B8, bt)
    B_p = bt * n_tiles
    if B_p != B:
        x2 = jnp.pad(x2, ((0, B_p - B), (0, 0)))   # padded rows discarded later

    # ---- parameters (weights optionally bf16; biases stay f32) ----
    w_args, b_args = [], []
    for w, b in zip(weights, biases):
        w_args.append(w.astype(jnp.bfloat16) if use_bf16_operands else w)
        b_args.append(b.reshape(1, -1).astype(jnp.float32))

    # Input / output tiled over batch only; parameters use a constant
    # index_map so they are DMA'd into VMEM once and reused across grid steps.
    in_specs = [pl.BlockSpec((bt, dim), lambda i: (i, 0))]
    args = [x2]
    for w, b in zip(w_args, b_args):
        in_specs.append(pl.BlockSpec(w.shape, lambda i: (0, 0)))
        in_specs.append(pl.BlockSpec(b.shape, lambda i: (0, 0)))
        args.append(w)
        args.append(b)

    # Advisory cost estimate so XLA can schedule neighbors around the call.
    flops = 2 * B_p * sum(w.shape[0] * w.shape[1] for w in weights)
    transcendentals = B_p * sum(w.shape[1] for w in weights[:-1])
    bytes_accessed = (
        x2.size * x2.dtype.itemsize
        + sum(w.size * w.dtype.itemsize for w in w_args)
        + sum(b.size * b.dtype.itemsize for b in b_args)
        + B_p * out_feat * jnp.dtype(momenta.dtype).itemsize)

    out = pl.pallas_call(
        _mlp_kernel,
        out_shape=jax.ShapeDtypeStruct((B_p, out_feat), momenta.dtype),
        grid_spec=pl.GridSpec(
            grid=(n_tiles,),
            in_specs=in_specs,
            out_specs=pl.BlockSpec((bt, out_feat), lambda i: (i, 0)),
        ),
        compiler_params=pltpu.CompilerParams(
            dimension_semantics=("parallel",)),
        cost_estimate=pl.CostEstimate(
            flops=flops,
            transcendentals=transcendentals,
            bytes_accessed=bytes_accessed),
    )(*args)

    return out[:B].reshape(*lead, dim, K)


def init_branch_params(key, layer_sizes, dim, K):
    """Xavier-normal weights, zero biases, matching the PyTorch __init__."""
    sizes = [dim] + list(layer_sizes) + [dim * K]
    weights, biases = [], []
    for i in range(1, len(sizes)):
        fan_in, fan_out = sizes[i - 1], sizes[i]
        key, sub = jax.random.split(key)
        std = (2.0 / (fan_in + fan_out)) ** 0.5
        # Stored as [in, out] (kernel layout); PyTorch stores [out, in].
        w = std * jax.random.normal(sub, (fan_in, fan_out), dtype=jnp.float32)
        b = jnp.zeros((1, fan_out), dtype=jnp.float32)
        weights.append(w)
        biases.append(b)
    return weights, biases


def branch_forward_ref(momenta, weights, biases, dim, K):
    """Pure-JAX reference mirroring the PyTorch forward (f32 throughout)."""
    z = momenta
    for li, (w, b) in enumerate(zip(weights, biases)):
        z = z @ w + b
        if li != len(weights) - 1:
            z = jnp.tanh(z)
    return z.reshape(*momenta.shape[:-1], dim, K)


if __name__ == "__main__":
    # Small shapes consistent with the module: momenta [batch, dim].
    # batch=300 exercises the pad-to-sublane path (300 -> 304 rows, one tile).
    batch, dim, K = 300, 4, 3
    layer_sizes = [32, 32]

    key = jax.random.PRNGKey(0)
    key, k_x = jax.random.split(key)
    momenta = jax.random.normal(k_x, (batch, dim), dtype=jnp.float32)

    weights, biases = init_branch_params(key, layer_sizes, dim, K)
    ref = branch_forward_ref(momenta, weights, biases, dim, K)

    # Exact f32 path: tight tolerance.
    fwd_f32 = jax.jit(functools.partial(branch_forward, dim=dim, K=K,
                                        use_bf16_operands=False))
    out_f32 = jax.block_until_ready(fwd_f32(momenta, weights, biases))
    assert out_f32.shape == (batch, dim, K)
    assert jnp.allclose(out_f32, ref, atol=1e-5, rtol=1e-5)

    # Default bf16-operand path (f32 accumulate + f32 tanh): looser tolerance.
    fwd_bf16 = jax.jit(functools.partial(branch_forward, dim=dim, K=K,
                                         use_bf16_operands=True))
    out_bf16 = jax.block_until_ready(fwd_bf16(momenta, weights, biases))
    assert out_bf16.shape == (batch, dim, K)
    assert jnp.allclose(out_bf16, ref, atol=5e-2, rtol=5e-2)

    print("KERNEL_OK")
</pallas_src>

<mosaic_0001>
module attributes {stable_mosaic.version = 11 : i64} {
  func.func @_mlp_kernel(%arg0: i32, %arg1: memref<304x4xf32, #tpu.memory_space<vmem>>, %arg2: memref<4x32xf32, #tpu.memory_space<vmem>>, %arg3: memref<1x32xf32, #tpu.memory_space<vmem>>, %arg4: memref<32x32xf32, #tpu.memory_space<vmem>>, %arg5: memref<1x32xf32, #tpu.memory_space<vmem>>, %arg6: memref<32x12xf32, #tpu.memory_space<vmem>>, %arg7: memref<1x12xf32, #tpu.memory_space<vmem>>, %arg8: memref<304x12xf32, #tpu.memory_space<vmem>>) attributes {dimension_semantics = [#tpu.dimension_semantics<parallel>], iteration_bounds = array<i64: 1>, scalar_prefetch = 0 : i64, scratch_operands = 0 : i64, tpu.core_type = #tpu.core_type<tc>, window_params = [{transform_indices = @transform_0, window_bounds = array<i64: 304, 4>}, {pipeline_mode = #tpu.pipeline_mode<synchronous>, transform_indices = @transform_1, window_bounds = array<i64: 4, 32>}, {pipeline_mode = #tpu.pipeline_mode<synchronous>, transform_indices = @transform_2, window_bounds = array<i64: 1, 32>}, {pipeline_mode = #tpu.pipeline_mode<synchronous>, transform_indices = @transform_3, window_bounds = array<i64: 32, 32>}, {pipeline_mode = #tpu.pipeline_mode<synchronous>, transform_indices = @transform_4, window_bounds = array<i64: 1, 32>}, {pipeline_mode = #tpu.pipeline_mode<synchronous>, transform_indices = @transform_5, window_bounds = array<i64: 32, 12>}, {pipeline_mode = #tpu.pipeline_mode<synchronous>, transform_indices = @transform_6, window_bounds = array<i64: 1, 12>}, {transform_indices = @transform_7, window_bounds = array<i64: 304, 12>}]} {
    %c0 = arith.constant 0 : index
    %c0_0 = arith.constant 0 : index
    %0 = vector.load %arg1[%c0, %c0_0] : memref<304x4xf32, #tpu.memory_space<vmem>>, vector<304x4xf32>
    %c0_1 = arith.constant 0 : index
    %c0_2 = arith.constant 0 : index
    %1 = vector.load %arg2[%c0_1, %c0_2] : memref<4x32xf32, #tpu.memory_space<vmem>>, vector<4x32xf32>
    %c0_3 = arith.constant 0 : index
    %c0_4 = arith.constant 0 : index
    %2 = vector.load %arg3[%c0_3, %c0_4] : memref<1x32xf32, #tpu.memory_space<vmem>>, vector<1x32xf32>
    %cst = arith.constant dense<0.000000e+00> : vector<304x32xf32>
    %3 = tpu.matmul %0, %1, %cst {dimension_numbers = #tpu.dot_dimension_numbers<[1], [0], [0], [1], [0, 0, 1, 1], [], []>} : vector<304x4xf32>, vector<4x32xf32>, vector<304x32xf32> -> vector<304x32xf32>
    %4 = vector.broadcast %2 : vector<1x32xf32> to vector<304x32xf32>
    %5 = arith.addf %3, %4 : vector<304x32xf32>
    %6 = math.tanh %5 : vector<304x32xf32>
    %c0_5 = arith.constant 0 : index
    %c0_6 = arith.constant 0 : index
    %7 = vector.load %arg4[%c0_5, %c0_6] : memref<32x32xf32, #tpu.memory_space<vmem>>, vector<32x32xf32>
    %c0_7 = arith.constant 0 : index
    %c0_8 = arith.constant 0 : index
    %8 = vector.load %arg5[%c0_7, %c0_8] : memref<1x32xf32, #tpu.memory_space<vmem>>, vector<1x32xf32>
    %cst_9 = arith.constant dense<0.000000e+00> : vector<304x32xf32>
    %9 = tpu.matmul %6, %7, %cst_9 {dimension_numbers = #tpu.dot_dimension_numbers<[1], [0], [0], [1], [0, 0, 1, 1], [], []>} : vector<304x32xf32>, vector<32x32xf32>, vector<304x32xf32> -> vector<304x32xf32>
    %10 = vector.broadcast %8 : vector<1x32xf32> to vector<304x32xf32>
    %11 = arith.addf %9, %10 : vector<304x32xf32>
    %12 = math.tanh %11 : vector<304x32xf32>
    %c0_10 = arith.constant 0 : index
    %c0_11 = arith.constant 0 : index
    %13 = vector.load %arg6[%c0_10, %c0_11] : memref<32x12xf32, #tpu.memory_space<vmem>>, vector<32x12xf32>
    %c0_12 = arith.constant 0 : index
    %c0_13 = arith.constant 0 : index
    %14 = vector.load %arg7[%c0_12, %c0_13] : memref<1x12xf32, #tpu.memory_space<vmem>>, vector<1x12xf32>
    %cst_14 = arith.constant dense<0.000000e+00> : vector<304x12xf32>
    %15 = tpu.matmul %12, %13, %cst_14 {dimension_numbers = #tpu.dot_dimension_numbers<[1], [0], [0], [1], [0, 0, 1, 1], [], []>} : vector<304x32xf32>, vector<32x12xf32>, vector<304x12xf32> -> vector<304x12xf32>
    %16 = vector.broadcast %14 : vector<1x12xf32> to vector<304x12xf32>
    %17 = arith.addf %15, %16 : vector<304x12xf32>
    %c0_15 = arith.constant 0 : index
    %c0_16 = arith.constant 0 : index
    %18 = vector.load %arg8[%c0_15, %c0_16] : memref<304x12xf32, #tpu.memory_space<vmem>>, vector<304x12xf32>
    tpu.vector_store %arg8[%c0_15, %c0_16], %17 {strides = array<i32>} : memref<304x12xf32, #tpu.memory_space<vmem>>, vector<304x12xf32>,
    return
  }
  func.func @transform_0(%arg0: i32) -> (i32, i32) {
    %c0_i32 = arith.constant 0 : i32
    %c0_i32_0 = arith.constant 0 : i32
    return %arg0, %c0_i32 : i32, i32
  }
  func.func @transform_1(%arg0: i32) -> (i32, i32) {
    %c0_i32 = arith.constant 0 : i32
    %c0_i32_0 = arith.constant 0 : i32
    %c0_i32_1 = arith.constant 0 : i32
    return %c0_i32, %c0_i32_0 : i32, i32
  }
  func.func @transform_2(%arg0: i32) -> (i32, i32) {
    %c0_i32 = arith.constant 0 : i32
    %c0_i32_0 = arith.constant 0 : i32
    %c0_i32_1 = arith.constant 0 : i32
    return %c0_i32, %c0_i32_0 : i32, i32
  }
  func.func @transform_3(%arg0: i32) -> (i32, i32) {
    %c0_i32 = arith.constant 0 : i32
    %c0_i32_0 = arith.constant 0 : i32
    %c0_i32_1 = arith.constant 0 : i32
    return %c0_i32, %c0_i32_0 : i32, i32
  }
  func.func @transform_4(%arg0: i32) -> (i32, i32) {
    %c0_i32 = arith.constant 0 : i32
    %c0_i32_0 = arith.constant 0 : i32
    %c0_i32_1 = arith.constant 0 : i32
    return %c0_i32, %c0_i32_0 : i32, i32
  }
  func.func @transform_5(%arg0: i32) -> (i32, i32) {
    %c0_i32 = arith.constant 0 : i32
    %c0_i32_0 = arith.constant 0 : i32
    %c0_i32_1 = arith.constant 0 : i32
    return %c0_i32, %c0_i32_0 : i32, i32
  }
  func.func @transform_6(%arg0: i32) -> (i32, i32) {
    %c0_i32 = arith.constant 0 : i32
    %c0_i32_0 = arith.constant 0 : i32
    %c0_i32_1 = arith.constant 0 : i32
    return %c0_i32, %c0_i32_0 : i32, i32
  }
  func.func @transform_7(%arg0: i32) -> (i32, i32) {
    %c0_i32 = arith.constant 0 : i32
    %c0_i32_0 = arith.constant 0 : i32
    return %arg0, %c0_i32 : i32, i32
  }
}

</mosaic_0001>

<llo_original>
// kernel: branch_forward.1
$region0: #{branch_forward.1}
  #allocation0 [shape = 'u32[]', space=smem, size = 0x4, offset = 0x4, fixed_abs, tag = 'smem constant byte address 0x4 - core index']
  #allocation1 [shape = 'u32[72,128]{1,0:T(1,128)}', space=vmem, size = 0x9000, scoped, tag = 'internal scratch']
  %s0 = inlined_call_operand.vmem [shape: f32[304,4], index: 0, kind: input, shape index: {}]
  %s1 = inlined_call_operand.vmem [shape: f32[4,32], index: 1, kind: input, shape index: {}]
  %s2 = inlined_call_operand.vmem [shape: f32[1,32], index: 2, kind: input, shape index: {}]
  %s3 = inlined_call_operand.vmem [shape: f32[32,32], index: 3, kind: input, shape index: {}]
  %s4 = inlined_call_operand.vmem [shape: f32[1,32], index: 4, kind: input, shape index: {}]
  %s5 = inlined_call_operand.vmem [shape: f32[32,12], index: 5, kind: input, shape index: {}]
  %s6 = inlined_call_operand.vmem [shape: f32[1,12], index: 6, kind: input, shape index: {}]
  %s7 = inlined_call_operand.vmem [shape: f32[304,12], index: 7, kind: output, shape index: {}]
  %s8 = sld [smem:[#allocation0]]
  $region38: #{branch_forward.1} parent=0
    _
  %s10 = ssub.s32 1, %s8
  %s11 = scalar_select 0, %s10, %s8
  // Predicated region
  $region2: #{branch_forward.1} parent=0 // pred_check
    _
  $region3: #{branch_forward.1} parent=0 // pred_check_branch
    %13 = sbr.rel (0) target = $region5
  $region4: #{branch_forward.1} parent=0 // pred_region
    _
  $region5: #{branch_forward.1} parent=0 // pred_fallthru
    _
  // Predicated region
  $region6: #{branch_forward.1} parent=0 // pred_check
    _
  $region7: #{branch_forward.1} parent=0 // pred_check_branch
    %15 = sbr.rel (0) target = $region9
  $region8: #{branch_forward.1} parent=0 // pred_region
    _
  $region9: #{branch_forward.1} parent=0 // pred_fallthru
    _
  // Predicated region
  $region10: #{branch_forward.1} parent=0 // pred_check
    _
  $region11: #{branch_forward.1} parent=0 // pred_check_branch
    %17 = sbr.rel (0) target = $region13
  $region12: #{branch_forward.1} parent=0 // pred_region
    _
  $region13: #{branch_forward.1} parent=0 // pred_fallthru
    _
  // Predicated region
  $region14: #{branch_forward.1} parent=0 // pred_check
    _
  $region15: #{branch_forward.1} parent=0 // pred_check_branch
    %19 = sbr.rel (0) target = $region17
  $region16: #{branch_forward.1} parent=0 // pred_region
    _
  $region17: #{branch_forward.1} parent=0 // pred_fallthru
    _
  // Predicated region
  $region18: #{branch_forward.1} parent=0 // pred_check
    _
  $region19: #{branch_forward.1} parent=0 // pred_check_branch
    %21 = sbr.rel (0) target = $region21
  $region20: #{branch_forward.1} parent=0 // pred_region
    _
  $region21: #{branch_forward.1} parent=0 // pred_fallthru
    _
  // Predicated region
  $region22: #{branch_forward.1} parent=0 // pred_check
    _
  $region23: #{branch_forward.1} parent=0 // pred_check_branch
    %23 = sbr.rel (0) target = $region25
  $region24: #{branch_forward.1} parent=0 // pred_region
    _
  $region25: #{branch_forward.1} parent=0 // pred_fallthru
    _
  // Predicated region
  $region26: #{branch_forward.1} parent=0 // pred_check
    _
  $region27: #{branch_forward.1} parent=0 // pred_check_branch
    %25 = sbr.rel (0) target = $region29
  $region28: #{branch_forward.1} parent=0 // pred_region
    _
  $region29: #{branch_forward.1} parent=0 // pred_fallthru
    _
  %v26 = vld [vmem:[%s0] sm:$0xff]
  %v27 = vld [vmem:[%s0 + $0x8] sm:$0xff]
  %v28 = vld [vmem:[%s0 + $0x10] sm:$0xff]
  %v29 = vld [vmem:[%s0 + $0x18] sm:$0xff]
  %v30 = vld [vmem:[%s0 + $0x20] sm:$0xff]
  %v31 = vld [vmem:[%s0 + $0x28] sm:$0xff]
  %v32 = vld [vmem:[%s0 + $0x30] sm:$0xff]
  %v33 = vld [vmem:[%s0 + $0x38] sm:$0xff]
  %v34 = vld [vmem:[%s0 + $0x40] sm:$0xff]
  %v35 = vld [vmem:[%s0 + $0x48] sm:$0xff]
  %v36 = vld [vmem:[%s0 + $0x50] sm:$0xff]
  %v37 = vld [vmem:[%s0 + $0x58] sm:$0xff]
  %v38 = vld [vmem:[%s0 + $0x60] sm:$0xff]
  %v39 = vld [vmem:[%s0 + $0x68] sm:$0xff]
  %v40 = vld [vmem:[%s0 + $0x70] sm:$0xff]
  %v41 = vld [vmem:[%s0 + $0x78] sm:$0xff]
  %v42 = vld [vmem:[%s0 + $0x80] sm:$0xff]
  %v43 = vld [vmem:[%s0 + $0x88] sm:$0xff]
  %v44 = vld [vmem:[%s0 + $0x90] sm:$0xff]
  %v45 = vld [vmem:[%s0 + $0x98] sm:$0xff]
  %v46 = vld [vmem:[%s0 + $0xa0] sm:$0xff]
  %v47 = vld [vmem:[%s0 + $0xa8] sm:$0xff]
  %v48 = vld [vmem:[%s0 + $0xb0] sm:$0xff]
  %v49 = vld [vmem:[%s0 + $0xb8] sm:$0xff]
  %v50 = vld [vmem:[%s0 + $0xc0] sm:$0xff]
  %v51 = vld [vmem:[%s0 + $0xc8] sm:$0xff]
  %v52 = vld [vmem:[%s0 + $0xd0] sm:$0xff]
  %v53 = vld [vmem:[%s0 + $0xd8] sm:$0xff]
  %v54 = vld [vmem:[%s0 + $0xe0] sm:$0xff]
  %v55 = vld [vmem:[%s0 + $0xe8] sm:$0xff]
  %v56 = vld [vmem:[%s0 + $0xf0] sm:$0xff]
  %v57 = vld [vmem:[%s0 + $0xf8] sm:$0xff]
  %v58 = vld [vmem:[%s0 + $0x100] sm:$0xff]
  %v59 = vld [vmem:[%s0 + $0x108] sm:$0xff]
  %v60 = vld [vmem:[%s0 + $0x110] sm:$0xff]
  %v61 = vld [vmem:[%s0 + $0x118] sm:$0xff]
  %v62 = vld [vmem:[%s0 + $0x120] sm:$0xff]
  %v63 = vld [vmem:[%s0 + $0x128] sm:$0xff]
  %v64 = vld [vmem:[%s1] sm:$0xf]
  %v65 = vld [vmem:[%s2] sm:$0x1]
  %v67 = vperm.slane %v65, 0
  %vm69 = vcmask 31744
  %v71 = vsel %vm69, %v26, 0
  %v74 = vsel %vm69, %v27, 0
  %v77 = vsel %vm69, %v28, 0
  %v80 = vsel %vm69, %v29, 0
  %v83 = vsel %vm69, %v30, 0
  %v86 = vsel %vm69, %v31, 0
  %v89 = vsel %vm69, %v32, 0
  %v92 = vsel %vm69, %v33, 0
  %v95 = vsel %vm69, %v34, 0
  %v98 = vsel %vm69, %v35, 0
  %v101 = vsel %vm69, %v36, 0
  %v104 = vsel %vm69, %v37, 0
  %v107 = vsel %vm69, %v38, 0
  %v110 = vsel %vm69, %v39, 0
  %v113 = vsel %vm69, %v40, 0
  %v116 = vsel %vm69, %v41, 0
  %v119 = vsel %vm69, %v42, 0
  %v122 = vsel %vm69, %v43, 0
  %v125 = vsel %vm69, %v44, 0
  %v128 = vsel %vm69, %v45, 0
  %v131 = vsel %vm69, %v46, 0
  %v134 = vsel %vm69, %v47, 0
  %v137 = vsel %vm69, %v48, 0
  %v140 = vsel %vm69, %v49, 0
  %v143 = vsel %vm69, %v50, 0
  %v146 = vsel %vm69, %v51, 0
  %v149 = vsel %vm69, %v52, 0
  %v152 = vsel %vm69, %v53, 0
  %v155 = vsel %vm69, %v54, 0
  %v158 = vsel %vm69, %v55, 0
  %v161 = vsel %vm69, %v56, 0
  %v164 = vsel %vm69, %v57, 0
  %v167 = vsel %vm69, %v58, 0
  %v170 = vsel %vm69, %v59, 0
  %v173 = vsel %vm69, %v60, 0
  %v176 = vsel %vm69, %v61, 0
  %v179 = vsel %vm69, %v62, 0
  %v182 = vsel %vm69, %v63, 0
  %vm184 = vcmask 1043456
  %v186 = vsel %vm184, %v64, 0
  %188 = vmatpush.msra.mxu0 0.0
  %189 = vmatpush.msra.mxu0 0.0
  %190 = vmatpush.msra.mxu0 0.0
  %191 = vmatpush.msra.mxu0 0.0
  %192 = vmatpush.msra.mxu0 0.0
  %193 = vmatpush.msra.mxu0 0.0
  %194 = vmatpush.msra.mxu0 0.0
  %195 = vmatpush.msra.mxu0 0.0
  %196 = vmatpush.msra.mxu0 0.0
  %197 = vmatpush.msra.mxu0 0.0
  %198 = vmatpush.msra.mxu0 0.0
  %199 = vmatpush.msra.mxu0 0.0
  %200 = vmatpush.msra.mxu0 0.0
  %201 = vmatpush.msra.mxu0 0.0
  %202 = vmatpush.msra.mxu0 0.0
  %203 = vmatpush.msra.mxu0 %v186
  %204 = vmatmul.f32.gmra.mxu0 %v71
  %v205 = vpop.f32.mrf.mxu0
  %v206 = vadd.f32 %v67, %v205
  %207 = vmatmul.f32.gmra.mxu0 %v74
  %v208 = vpop.f32.mrf.mxu0
  %v209 = vadd.f32 %v67, %v208
  %210 = vmatmul.f32.gmra.mxu0 %v77
  %v211 = vpop.f32.mrf.mxu0
  %v212 = vadd.f32 %v67, %v211
  %213 = vmatmul.f32.gmra.mxu0 %v80
  %v214 = vpop.f32.mrf.mxu0
  %v215 = vadd.f32 %v67, %v214
  %216 = vmatmul.f32.gmra.mxu0 %v83
  %v217 = vpop.f32.mrf.mxu0
  %v218 = vadd.f32 %v67, %v217
  %219 = vmatmul.f32.gmra.mxu0 %v86
  %v220 = vpop.f32.mrf.mxu0
  %v221 = vadd.f32 %v67, %v220
  %222 = vmatmul.f32.gmra.mxu0 %v89
  %v223 = vpop.f32.mrf.mxu0
  %v224 = vadd.f32 %v67, %v223
  %225 = vmatmul.f32.gmra.mxu0 %v92
  %v226 = vpop.f32.mrf.mxu0
  %v227 = vadd.f32 %v67, %v226
  %228 = vmatmul.f32.gmra.mxu0 %v95
  %v229 = vpop.f32.mrf.mxu0
  %v230 = vadd.f32 %v67, %v229
  %231 = vmatmul.f32.gmra.mxu0 %v98
  %v232 = vpop.f32.mrf.mxu0
  %v233 = vadd.f32 %v67, %v232
  %234 = vmatmul.f32.gmra.mxu0 %v101
  %v235 = vpop.f32.mrf.mxu0
  %v236 = vadd.f32 %v67, %v235
  %237 = vmatmul.f32.gmra.mxu0 %v104
  %v238 = vpop.f32.mrf.mxu0
  %v239 = vadd.f32 %v67, %v238
  %240 = vmatmul.f32.gmra.mxu0 %v107
  %v241 = vpop.f32.mrf.mxu0
  %v242 = vadd.f32 %v67, %v241
  %243 = vmatmul.f32.gmra.mxu0 %v110
  %v244 = vpop.f32.mrf.mxu0
  %v245 = vadd.f32 %v67, %v244
  %246 = vmatmul.f32.gmra.mxu0 %v113
  %v247 = vpop.f32.mrf.mxu0
  %v248 = vadd.f32 %v67, %v247
  %249 = vmatmul.f32.gmra.mxu0 %v116
  %v250 = vpop.f32.mrf.mxu0
  %v251 = vadd.f32 %v67, %v250
  %252 = vmatmul.f32.gmra.mxu0 %v119
  %v253 = vpop.f32.mrf.mxu0
  %v254 = vadd.f32 %v67, %v253
  %255 = vmatmul.f32.gmra.mxu0 %v122
  %v256 = vpop.f32.mrf.mxu0
  %v257 = vadd.f32 %v67, %v256
  %258 = vmatmul.f32.gmra.mxu0 %v125
  %v259 = vpop.f32.mrf.mxu0
  %v260 = vadd.f32 %v67, %v259
  %261 = vmatmul.f32.gmra.mxu0 %v128
  %v262 = vpop.f32.mrf.mxu0
  %v263 = vadd.f32 %v67, %v262
  %264 = vmatmul.f32.gmra.mxu0 %v131
  %v265 = vpop.f32.mrf.mxu0
  %v266 = vadd.f32 %v67, %v265
  %267 = vmatmul.f32.gmra.mxu0 %v134
  %v268 = vpop.f32.mrf.mxu0
  %v269 = vadd.f32 %v67, %v268
  %270 = vmatmul.f32.gmra.mxu0 %v137
  %v271 = vpop.f32.mrf.mxu0
  %v272 = vadd.f32 %v67, %v271
  %273 = vmatmul.f32.gmra.mxu0 %v140
  %v274 = vpop.f32.mrf.mxu0
  %v275 = vadd.f32 %v67, %v274
  %276 = vmatmul.f32.gmra.mxu0 %v143
  %v277 = vpop.f32.mrf.mxu0
  %v278 = vadd.f32 %v67, %v277
  %279 = vmatmul.f32.gmra.mxu0 %v146
  %v280 = vpop.f32.mrf.mxu0
  %v281 = vadd.f32 %v67, %v280
  %282 = vmatmul.f32.gmra.mxu0 %v149
  %v283 = vpop.f32.mrf.mxu0
  %v284 = vadd.f32 %v67, %v283
  %285 = vmatmul.f32.gmra.mxu0 %v152
  %v286 = vpop.f32.mrf.mxu0
  %v287 = vadd.f32 %v67, %v286
  %288 = vmatmul.f32.gmra.mxu0 %v155
  %v289 = vpop.f32.mrf.mxu0
  %v290 = vadd.f32 %v67, %v289
  %291 = vmatmul.f32.gmra.mxu0 %v158
  %v292 = vpop.f32.mrf.mxu0
  %v293 = vadd.f32 %v67, %v292
  %294 = vmatmul.f32.gmra.mxu0 %v161
  %v295 = vpop.f32.mrf.mxu0
  %v296 = vadd.f32 %v67, %v295
  %297 = vmatmul.f32.gmra.mxu0 %v164
  %v298 = vpop.f32.mrf.mxu0
  %v299 = vadd.f32 %v67, %v298
  %300 = vmatmul.f32.gmra.mxu0 %v167
  %v301 = vpop.f32.mrf.mxu0
  %v302 = vadd.f32 %v67, %v301
  %303 = vmatmul.f32.gmra.mxu0 %v170
  %v304 = vpop.f32.mrf.mxu0
  %v305 = vadd.f32 %v67, %v304
  %306 = vmatmul.f32.gmra.mxu0 %v173
  %v307 = vpop.f32.mrf.mxu0
  %v308 = vadd.f32 %v67, %v307
  %309 = vmatmul.f32.gmra.mxu0 %v176
  %v310 = vpop.f32.mrf.mxu0
  %v311 = vadd.f32 %v67, %v310
  %312 = vmatmul.f32.gmra.mxu0 %v179
  %v313 = vpop.f32.mrf.mxu0
  %v314 = vadd.f32 %v67, %v313
  %315 = vmatmul.f32.gmra.mxu0 %v182
  %v316 = vpop.f32.mrf.mxu0
  %v317 = vadd.f32 %v67, %v316
  %318 = vdwg.mxu0
  %v319 = vtanh.pop %v206
  %v320 = vtanh.pop %v209
  %v321 = vtanh.pop %v212
  %v322 = vtanh.pop %v215
  %v323 = vtanh.pop %v218
  %v324 = vtanh.pop %v221
  %v325 = vtanh.pop %v224
  %v326 = vtanh.pop %v227
  %v327 = vtanh.pop %v230
  %v328 = vtanh.pop %v233
  %v329 = vtanh.pop %v236
  %v330 = vtanh.pop %v239
  %v331 = vtanh.pop %v242
  %v332 = vtanh.pop %v245
  %v333 = vtanh.pop %v248
  %v334 = vtanh.pop %v251
  %v335 = vtanh.pop %v254
  %v336 = vtanh.pop %v257
  %v337 = vtanh.pop %v260
  %v338 = vtanh.pop %v263
  %v339 = vtanh.pop %v266
  %v340 = vtanh.pop %v269
  %v341 = vtanh.pop %v272
  %v342 = vtanh.pop %v275
  %v343 = vtanh.pop %v278
  %v344 = vtanh.pop %v281
  %v345 = vtanh.pop %v284
  %v346 = vtanh.pop %v287
  %v347 = vtanh.pop %v290
  %v348 = vtanh.pop %v293
  %v349 = vtanh.pop %v296
  %v350 = vtanh.pop %v299
  %v351 = vtanh.pop %v302
  %v352 = vtanh.pop %v305
  %v353 = vtanh.pop %v308
  %v354 = vtanh.pop %v311
  %v355 = vtanh.pop %v314
  %v356 = vtanh.pop %v317
  %v357 = vld [vmem:[%s3] sm:$0xff]
  %v358 = vld [vmem:[%s3 + $0x8] sm:$0xff]
  %v359 = vld [vmem:[%s3 + $0x10] sm:$0xff]
  %v360 = vld [vmem:[%s3 + $0x18] sm:$0xff]
  %v361 = vld [vmem:[%s4] sm:$0x1]
  %v363 = vperm.slane %v361, 0
  %vm365 = vcmask 261120
  %v367 = vsel %vm365, %v319, 0
  %v370 = vsel %vm365, %v320, 0
  %v373 = vsel %vm365, %v321, 0
  %v376 = vsel %vm365, %v322, 0
  %v379 = vsel %vm365, %v323, 0
  %v382 = vsel %vm365, %v324, 0
  %v385 = vsel %vm365, %v325, 0
  %v388 = vsel %vm365, %v326, 0
  %v391 = vsel %vm365, %v327, 0
  %v394 = vsel %vm365, %v328, 0
  %v397 = vsel %vm365, %v329, 0
  %v400 = vsel %vm365, %v330, 0
  %v403 = vsel %vm365, %v331, 0
  %v406 = vsel %vm365, %v332, 0
  %v409 = vsel %vm365, %v333, 0
  %v412 = vsel %vm365, %v334, 0
  %v415 = vsel %vm365, %v335, 0
  %v418 = vsel %vm365, %v336, 0
  %v421 = vsel %vm365, %v337, 0
  %v424 = vsel %vm365, %v338, 0
  %v427 = vsel %vm365, %v339, 0
  %v430 = vsel %vm365, %v340, 0
  %v433 = vsel %vm365, %v341, 0
  %v436 = vsel %vm365, %v342, 0
  %v439 = vsel %vm365, %v343, 0
  %v442 = vsel %vm365, %v344, 0
  %v445 = vsel %vm365, %v345, 0
  %v448 = vsel %vm365, %v346, 0
  %v451 = vsel %vm365, %v347, 0
  %v454 = vsel %vm365, %v348, 0
  %v457 = vsel %vm365, %v349, 0
  %v460 = vsel %vm365, %v350, 0
  %v463 = vsel %vm365, %v351, 0
  %v466 = vsel %vm365, %v352, 0
  %v469 = vsel %vm365, %v353, 0
  %v472 = vsel %vm365, %v354, 0
  %v475 = vsel %vm365, %v355, 0
  %v478 = vsel %vm365, %v356, 0
  %480 = vmatpush.msra.mxu0 0.0
  %481 = vmatpush.msra.mxu0 0.0
  %482 = vmatpush.msra.mxu0 0.0
  %483 = vmatpush.msra.mxu0 0.0
  %484 = vmatpush.msra.mxu0 0.0
  %485 = vmatpush.msra.mxu0 0.0
  %486 = vmatpush.msra.mxu0 0.0
  %487 = vmatpush.msra.mxu0 0.0
  %488 = vmatpush.msra.mxu0 0.0
  %489 = vmatpush.msra.mxu0 0.0
  %490 = vmatpush.msra.mxu0 0.0
  %491 = vmatpush.msra.mxu0 0.0
  %492 = vmatpush.msra.mxu0 %v360
  %493 = vmatpush.msra.mxu0 %v359
  %494 = vmatpush.msra.mxu0 %v358
  %495 = vmatpush.msra.mxu0 %v357
  %496 = vmatmul.f32.gmra.mxu0 %v367
  %v497 = vpop.f32.mrf.mxu0
  %v498 = vadd.f32 %v363, %v497
  %499 = vmatmul.f32.gmra.mxu0 %v370
  %v500 = vpop.f32.mrf.mxu0
  %v501 = vadd.f32 %v363, %v500
  %502 = vmatmul.f32.gmra.mxu0 %v373
  %v503 = vpop.f32.mrf.mxu0
  %v504 = vadd.f32 %v363, %v503
  %505 = vmatmul.f32.gmra.mxu0 %v376
  %v506 = vpop.f32.mrf.mxu0
  %v507 = vadd.f32 %v363, %v506
  %508 = vmatmul.f32.gmra.mxu0 %v379
  %v509 = vpop.f32.mrf.mxu0
  %v510 = vadd.f32 %v363, %v509
  %511 = vmatmul.f32.gmra.mxu0 %v382
  %v512 = vpop.f32.mrf.mxu0
  %v513 = vadd.f32 %v363, %v512
  %514 = vmatmul.f32.gmra.mxu0 %v385
  %v515 = vpop.f32.mrf.mxu0
  %v516 = vadd.f32 %v363, %v515
  %517 = vmatmul.f32.gmra.mxu0 %v388
  %v518 = vpop.f32.mrf.mxu0
  %v519 = vadd.f32 %v363, %v518
  %520 = vmatmul.f32.gmra.mxu0 %v391
  %v521 = vpop.f32.mrf.mxu0
  %v522 = vadd.f32 %v363, %v521
  %523 = vmatmul.f32.gmra.mxu0 %v394
  %v524 = vpop.f32.mrf.mxu0
  %v525 = vadd.f32 %v363, %v524
  %526 = vmatmul.f32.gmra.mxu0 %v397
  %v527 = vpop.f32.mrf.mxu0
  %v528 = vadd.f32 %v363, %v527
  %529 = vmatmul.f32.gmra.mxu0 %v400
  %v530 = vpop.f32.mrf.mxu0
  %v531 = vadd.f32 %v363, %v530
  %532 = vmatmul.f32.gmra.mxu0 %v403
  %v533 = vpop.f32.mrf.mxu0
  %v534 = vadd.f32 %v363, %v533
  %535 = vmatmul.f32.gmra.mxu0 %v406
  %v536 = vpop.f32.mrf.mxu0
  %v537 = vadd.f32 %v363, %v536
  %538 = vmatmul.f32.gmra.mxu0 %v409
  %v539 = vpop.f32.mrf.mxu0
  %v540 = vadd.f32 %v363, %v539
  %541 = vmatmul.f32.gmra.mxu0 %v412
  %v542 = vpop.f32.mrf.mxu0
  %v543 = vadd.f32 %v363, %v542
  %544 = vmatmul.f32.gmra.mxu0 %v415
  %v545 = vpop.f32.mrf.mxu0
  %v546 = vadd.f32 %v363, %v545
  %547 = vmatmul.f32.gmra.mxu0 %v418
  %v548 = vpop.f32.mrf.mxu0
  %v549 = vadd.f32 %v363, %v548
  %550 = vmatmul.f32.gmra.mxu0 %v421
  %v551 = vpop.f32.mrf.mxu0
  %v552 = vadd.f32 %v363, %v551
  %553 = vmatmul.f32.gmra.mxu0 %v424
  %v554 = vpop.f32.mrf.mxu0
  %v555 = vadd.f32 %v363, %v554
  %556 = vmatmul.f32.gmra.mxu0 %v427
  %v557 = vpop.f32.mrf.mxu0
  %v558 = vadd.f32 %v363, %v557
  %559 = vmatmul.f32.gmra.mxu0 %v430
  %v560 = vpop.f32.mrf.mxu0
  %v561 = vadd.f32 %v363, %v560
  %562 = vmatmul.f32.gmra.mxu0 %v433
  %v563 = vpop.f32.mrf.mxu0
  %v564 = vadd.f32 %v363, %v563
  %565 = vmatmul.f32.gmra.mxu0 %v436
  %v566 = vpop.f32.mrf.mxu0
  %v567 = vadd.f32 %v363, %v566
  %568 = vmatmul.f32.gmra.mxu0 %v439
  %v569 = vpop.f32.mrf.mxu0
  %v570 = vadd.f32 %v363, %v569
  %571 = vmatmul.f32.gmra.mxu0 %v442
  %v572 = vpop.f32.mrf.mxu0
  %v573 = vadd.f32 %v363, %v572
  %574 = vmatmul.f32.gmra.mxu0 %v445
  %v575 = vpop.f32.mrf.mxu0
  %v576 = vadd.f32 %v363, %v575
  %577 = vmatmul.f32.gmra.mxu0 %v448
  %v578 = vpop.f32.mrf.mxu0
  %v579 = vadd.f32 %v363, %v578
  %580 = vmatmul.f32.gmra.mxu0 %v451
  %v581 = vpop.f32.mrf.mxu0
  %v582 = vadd.f32 %v363, %v581
  %583 = vmatmul.f32.gmra.mxu0 %v454
  %v584 = vpop.f32.mrf.mxu0
  %v585 = vadd.f32 %v363, %v584
  %586 = vmatmul.f32.gmra.mxu0 %v457
  %v587 = vpop.f32.mrf.mxu0
  %v588 = vadd.f32 %v363, %v587
  %589 = vmatmul.f32.gmra.mxu0 %v460
  %v590 = vpop.f32.mrf.mxu0
  %v591 = vadd.f32 %v363, %v590
  %592 = vmatmul.f32.gmra.mxu0 %v463
  %v593 = vpop.f32.mrf.mxu0
  %v594 = vadd.f32 %v363, %v593
  %595 = vmatmul.f32.gmra.mxu0 %v466
  %v596 = vpop.f32.mrf.mxu0
  %v597 = vadd.f32 %v363, %v596
  %598 = vmatmul.f32.gmra.mxu0 %v469
  %v599 = vpop.f32.mrf.mxu0
  %v600 = vadd.f32 %v363, %v599
  %601 = vmatmul.f32.gmra.mxu0 %v472
  %v602 = vpop.f32.mrf.mxu0
  %v603 = vadd.f32 %v363, %v602
  %604 = vmatmul.f32.gmra.mxu0 %v475
  %v605 = vpop.f32.mrf.mxu0
  %v606 = vadd.f32 %v363, %v605
  %607 = vmatmul.f32.gmra.mxu0 %v478
  %v608 = vpop.f32.mrf.mxu0
  %v609 = vadd.f32 %v363, %v608
  %610 = vdwg.mxu0
  %v611 = vtanh.pop %v498
  %v612 = vtanh.pop %v501
  %v613 = vtanh.pop %v504
  %v614 = vtanh.pop %v507
  %v615 = vtanh.pop %v510
  %v616 = vtanh.pop %v513
  %v617 = vtanh.pop %v516
  %v618 = vtanh.pop %v519
  %v619 = vtanh.pop %v522
  %v620 = vtanh.pop %v525
  %v621 = vtanh.pop %v528
  %v622 = vtanh.pop %v531
  %v623 = vtanh.pop %v534
  %v624 = vtanh.pop %v537
  %v625 = vtanh.pop %v540
  %v626 = vtanh.pop %v543
  %v627 = vtanh.pop %v546
  %v628 = vtanh.pop %v549
  %v629 = vtanh.pop %v552
  %v630 = vtanh.pop %v555
  %v631 = vtanh.pop %v558
  %v632 = vtanh.pop %v561
  %v633 = vtanh.pop %v564
  %v634 = vtanh.pop %v567
  %v635 = vtanh.pop %v570
  %v636 = vtanh.pop %v573
  %v637 = vtanh.pop %v576
  %v638 = vtanh.pop %v579
  %v639 = vtanh.pop %v582
  %v640 = vtanh.pop %v585
  %v641 = vtanh.pop %v588
  %v642 = vtanh.pop %v591
  %v643 = vtanh.pop %v594
  %v644 = vtanh.pop %v597
  %v645 = vtanh.pop %v600
  %v646 = vtanh.pop %v603
  %v647 = vtanh.pop %v606
  %v648 = vtanh.pop %v609
  %v649 = vld [vmem:[%s5] sm:$0xff]
  %v650 = vld [vmem:[%s5 + $0x8] sm:$0xff]
  %v651 = vld [vmem:[%s5 + $0x10] sm:$0xff]
  %v652 = vld [vmem:[%s5 + $0x18] sm:$0xff]
  %v653 = vld [vmem:[%s6] sm:$0x1]
  %v655 = vperm.slane %v653, 0
  %v658 = vsel %vm365, %v611, 0
  %v661 = vsel %vm365, %v612, 0
  %v664 = vsel %vm365, %v613, 0
  %v667 = vsel %vm365, %v614, 0
  %v670 = vsel %vm365, %v615, 0
  %v673 = vsel %vm365, %v616, 0
  %v676 = vsel %vm365, %v617, 0
  %v679 = vsel %vm365, %v618, 0
  %v682 = vsel %vm365, %v619, 0
  %v685 = vsel %vm365, %v620, 0
  %v688 = vsel %vm365, %v621, 0
  %v691 = vsel %vm365, %v622, 0
  %v694 = vsel %vm365, %v623, 0
  %v697 = vsel %vm365, %v624, 0
  %v700 = vsel %vm365, %v625, 0
  %v703 = vsel %vm365, %v626, 0
  %v706 = vsel %vm365, %v627, 0
  %v709 = vsel %vm365, %v628, 0
  %v712 = vsel %vm365, %v629, 0
  %v715 = vsel %vm365, %v630, 0
  %v718 = vsel %vm365, %v631, 0
  %v721 = vsel %vm365, %v632, 0
  %v724 = vsel %vm365, %v633, 0
  %v727 = vsel %vm365, %v634, 0
  %v730 = vsel %vm365, %v635, 0
  %v733 = vsel %vm365, %v636, 0
  %v736 = vsel %vm365, %v637, 0
  %v739 = vsel %vm365, %v638, 0
  %v742 = vsel %vm365, %v639, 0
  %v745 = vsel %vm365, %v640, 0
  %v748 = vsel %vm365, %v641, 0
  %v751 = vsel %vm365, %v642, 0
  %v754 = vsel %vm365, %v643, 0
  %v757 = vsel %vm365, %v644, 0
  %v760 = vsel %vm365, %v645, 0
  %v763 = vsel %vm365, %v646, 0
  %v766 = vsel %vm365, %v647, 0
  %v769 = vsel %vm365, %v648, 0
  %771 = vmatpush.msra.mxu0 0.0
  %772 = vmatpush.msra.mxu0 0.0
  %773 = vmatpush.msra.mxu0 0.0
  %774 = vmatpush.msra.mxu0 0.0
  %775 = vmatpush.msra.mxu0 0.0
  %776 = vmatpush.msra.mxu0 0.0
  %777 = vmatpush.msra.mxu0 0.0
  %778 = vmatpush.msra.mxu0 0.0
  %779 = vmatpush.msra.mxu0 0.0
  %780 = vmatpush.msra.mxu0 0.0
  %781 = vmatpush.msra.mxu0 0.0
  %782 = vmatpush.msra.mxu0 0.0
  %783 = vmatpush.msra.mxu0 %v652
  %784 = vmatpush.msra.mxu0 %v651
  %785 = vmatpush.msra.mxu0 %v650
  %786 = vmatpush.msra.mxu0 %v649
  %787 = vmatmul.f32.gmra.mxu0 %v658
  %v788 = vpop.f32.mrf.mxu0
  %v789 = vadd.f32 %v655, %v788
  %790 = vmatmul.f32.gmra.mxu0 %v661
  %v791 = vpop.f32.mrf.mxu0
  %v792 = vadd.f32 %v655, %v791
  %793 = vmatmul.f32.gmra.mxu0 %v664
  %v794 = vpop.f32.mrf.mxu0
  %v795 = vadd.f32 %v655, %v794
  %796 = vmatmul.f32.gmra.mxu0 %v667
  %v797 = vpop.f32.mrf.mxu0
  %v798 = vadd.f32 %v655, %v797
  %799 = vmatmul.f32.gmra.mxu0 %v670
  %v800 = vpop.f32.mrf.mxu0
  %v801 = vadd.f32 %v655, %v800
  %802 = vmatmul.f32.gmra.mxu0 %v673
  %v803 = vpop.f32.mrf.mxu0
  %v804 = vadd.f32 %v655, %v803
  %805 = vmatmul.f32.gmra.mxu0 %v676
  %v806 = vpop.f32.mrf.mxu0
  %v807 = vadd.f32 %v655, %v806
  %808 = vmatmul.f32.gmra.mxu0 %v679
  %v809 = vpop.f32.mrf.mxu0
  %v810 = vadd.f32 %v655, %v809
  %811 = vmatmul.f32.gmra.mxu0 %v682
  %v812 = vpop.f32.mrf.mxu0
  %v813 = vadd.f32 %v655, %v812
  %814 = vmatmul.f32.gmra.mxu0 %v685
  %v815 = vpop.f32.mrf.mxu0
  %v816 = vadd.f32 %v655, %v815
  %817 = vmatmul.f32.gmra.mxu0 %v688
  %v818 = vpop.f32.mrf.mxu0
  %v819 = vadd.f32 %v655, %v818
  %820 = vmatmul.f32.gmra.mxu0 %v691
  %v821 = vpop.f32.mrf.mxu0
  %v822 = vadd.f32 %v655, %v821
  %823 = vmatmul.f32.gmra.mxu0 %v694
  %v824 = vpop.f32.mrf.mxu0
  %v825 = vadd.f32 %v655, %v824
  %826 = vmatmul.f32.gmra.mxu0 %v697
  %v827 = vpop.f32.mrf.mxu0
  %v828 = vadd.f32 %v655, %v827
  %829 = vmatmul.f32.gmra.mxu0 %v700
  %v830 = vpop.f32.mrf.mxu0
  %v831 = vadd.f32 %v655, %v830
  %832 = vmatmul.f32.gmra.mxu0 %v703
  %v833 = vpop.f32.mrf.mxu0
  %v834 = vadd.f32 %v655, %v833
  %835 = vmatmul.f32.gmra.mxu0 %v706
  %v836 = vpop.f32.mrf.mxu0
  %v837 = vadd.f32 %v655, %v836
  %838 = vmatmul.f32.gmra.mxu0 %v709
  %v839 = vpop.f32.mrf.mxu0
  %v840 = vadd.f32 %v655, %v839
  %841 = vmatmul.f32.gmra.mxu0 %v712
  %v842 = vpop.f32.mrf.mxu0
  %v843 = vadd.f32 %v655, %v842
  %844 = vmatmul.f32.gmra.mxu0 %v715
  %v845 = vpop.f32.mrf.mxu0
  %v846 = vadd.f32 %v655, %v845
  %847 = vmatmul.f32.gmra.mxu0 %v718
  %v848 = vpop.f32.mrf.mxu0
  %v849 = vadd.f32 %v655, %v848
  %850 = vmatmul.f32.gmra.mxu0 %v721
  %v851 = vpop.f32.mrf.mxu0
  %v852 = vadd.f32 %v655, %v851
  %853 = vmatmul.f32.gmra.mxu0 %v724
  %v854 = vpop.f32.mrf.mxu0
  %v855 = vadd.f32 %v655, %v854
  %856 = vmatmul.f32.gmra.mxu0 %v727
  %v857 = vpop.f32.mrf.mxu0
  %v858 = vadd.f32 %v655, %v857
  %859 = vmatmul.f32.gmra.mxu0 %v730
  %v860 = vpop.f32.mrf.mxu0
  %v861 = vadd.f32 %v655, %v860
  %862 = vmatmul.f32.gmra.mxu0 %v733
  %v863 = vpop.f32.mrf.mxu0
  %v864 = vadd.f32 %v655, %v863
  %865 = vmatmul.f32.gmra.mxu0 %v736
  %v866 = vpop.f32.mrf.mxu0
  %v867 = vadd.f32 %v655, %v866
  %868 = vmatmul.f32.gmra.mxu0 %v739
  %v869 = vpop.f32.mrf.mxu0
  %v870 = vadd.f32 %v655, %v869
  %871 = vmatmul.f32.gmra.mxu0 %v742
  %v872 = vpop.f32.mrf.mxu0
  %v873 = vadd.f32 %v655, %v872
  %874 = vmatmul.f32.gmra.mxu0 %v745
  %v875 = vpop.f32.mrf.mxu0
  %v876 = vadd.f32 %v655, %v875
  %877 = vmatmul.f32.gmra.mxu0 %v748
  %v878 = vpop.f32.mrf.mxu0
  %v879 = vadd.f32 %v655, %v878
  %880 = vmatmul.f32.gmra.mxu0 %v751
  %v881 = vpop.f32.mrf.mxu0
  %v882 = vadd.f32 %v655, %v881
  %883 = vmatmul.f32.gmra.mxu0 %v754
  %v884 = vpop.f32.mrf.mxu0
  %v885 = vadd.f32 %v655, %v884
  %886 = vmatmul.f32.gmra.mxu0 %v757
  %v887 = vpop.f32.mrf.mxu0
  %v888 = vadd.f32 %v655, %v887
  %889 = vmatmul.f32.gmra.mxu0 %v760
  %v890 = vpop.f32.mrf.mxu0
  %v891 = vadd.f32 %v655, %v890
  %892 = vmatmul.f32.gmra.mxu0 %v763
  %v893 = vpop.f32.mrf.mxu0
  %v894 = vadd.f32 %v655, %v893
  %895 = vmatmul.f32.gmra.mxu0 %v766
  %v896 = vpop.f32.mrf.mxu0
  %v897 = vadd.f32 %v655, %v896
  %898 = vmatmul.f32.gmra.mxu0 %v769
  %v899 = vpop.f32.mrf.mxu0
  %v900 = vadd.f32 %v655, %v899
  %901 = vdwg.mxu0
  %vm902 = vcmask 97280
  %903 = vst.msk [vmem:[%s7] sm:$0xff] %vm902, %v789
  %904 = vst.msk [vmem:[%s7 + $0x8] sm:$0xff] %vm902, %v792
  %905 = vst.msk [vmem:[%s7 + $0x10] sm:$0xff] %vm902, %v795
  %906 = vst.msk [vmem:[%s7 + $0x18] sm:$0xff] %vm902, %v798
  %907 = vst.msk [vmem:[%s7 + $0x20] sm:$0xff] %vm902, %v801
  %908 = vst.msk [vmem:[%s7 + $0x28] sm:$0xff] %vm902, %v804
  %909 = vst.msk [vmem:[%s7 + $0x30] sm:$0xff] %vm902, %v807
  %910 = vst.msk [vmem:[%s7 + $0x38] sm:$0xff] %vm902, %v810
  %911 = vst.msk [vmem:[%s7 + $0x40] sm:$0xff] %vm902, %v813
  %912 = vst.msk [vmem:[%s7 + $0x48] sm:$0xff] %vm902, %v816
  %913 = vst.msk [vmem:[%s7 + $0x50] sm:$0xff] %vm902, %v819
  %914 = vst.msk [vmem:[%s7 + $0x58] sm:$0xff] %vm902, %v822
  %915 = vst.msk [vmem:[%s7 + $0x60] sm:$0xff] %vm902, %v825
  %916 = vst.msk [vmem:[%s7 + $0x68] sm:$0xff] %vm902, %v828
  %917 = vst.msk [vmem:[%s7 + $0x70] sm:$0xff] %vm902, %v831
  %918 = vst.msk [vmem:[%s7 + $0x78] sm:$0xff] %vm902, %v834
  %919 = vst.msk [vmem:[%s7 + $0x80] sm:$0xff] %vm902, %v837
  %920 = vst.msk [vmem:[%s7 + $0x88] sm:$0xff] %vm902, %v840
  %921 = vst.msk [vmem:[%s7 + $0x90] sm:$0xff] %vm902, %v843
  %922 = vst.msk [vmem:[%s7 + $0x98] sm:$0xff] %vm902, %v846
  %923 = vst.msk [vmem:[%s7 + $0xa0] sm:$0xff] %vm902, %v849
  %924 = vst.msk [vmem:[%s7 + $0xa8] sm:$0xff] %vm902, %v852
  %925 = vst.msk [vmem:[%s7 + $0xb0] sm:$0xff] %vm902, %v855
  %926 = vst.msk [vmem:[%s7 + $0xb8] sm:$0xff] %vm902, %v858
  %927 = vst.msk [vmem:[%s7 + $0xc0] sm:$0xff] %vm902, %v861
  %928 = vst.msk [vmem:[%s7 + $0xc8] sm:$0xff] %vm902, %v864
  %929 = vst.msk [vmem:[%s7 + $0xd0] sm:$0xff] %vm902, %v867
  %930 = vst.msk [vmem:[%s7 + $0xd8] sm:$0xff] %vm902, %v870
  %931 = vst.msk [vmem:[%s7 + $0xe0] sm:$0xff] %vm902, %v873
  %932 = vst.msk [vmem:[%s7 + $0xe8] sm:$0xff] %vm902, %v876
  %933 = vst.msk [vmem:[%s7 + $0xf0] sm:$0xff] %vm902, %v879
  %934 = vst.msk [vmem:[%s7 + $0xf8] sm:$0xff] %vm902, %v882
  %935 = vst.msk [vmem:[%s7 + $0x100] sm:$0xff] %vm902, %v885
  %936 = vst.msk [vmem:[%s7 + $0x108] sm:$0xff] %vm902, %v888
  %937 = vst.msk [vmem:[%s7 + $0x110] sm:$0xff] %vm902, %v891
  %938 = vst.msk [vmem:[%s7 + $0x118] sm:$0xff] %vm902, %v894
  %939 = vst.msk [vmem:[%s7 + $0x120] sm:$0xff] %vm902, %v897
  %940 = vst.msk [vmem:[%s7 + $0x128] sm:$0xff] %vm902, %v900
  // Predicated region
  $region30: #{branch_forward.1} parent=0 // pred_check
    _
  $region31: #{branch_forward.1} parent=0 // pred_check_branch
    %942 = sbr.rel (0) target = $region33
  $region32: #{branch_forward.1} parent=0 // pred_region
    _
  $region33: #{branch_forward.1} parent=0 // pred_fallthru
    _
  // Predicated region
  $region34: #{branch_forward.1} parent=0 // pred_check
    _
  $region35: #{branch_forward.1} parent=0 // pred_check_branch
    %944 = sbr.rel (0) target = $region37
  $region36: #{branch_forward.1} parent=0 // pred_region
    _
  $region37: #{branch_forward.1} parent=0 // pred_fallthru
    _

</llo_original>
